<compile_context>
chip_gen: v7x
topology: tpu7x:2x2x1
jax: 0.10.0
libtpu: 0.0.40
codegen_flags: <defaults>
</compile_context>

<pallas_src>
import jax
import jax.numpy as jnp
from jax.experimental import pallas as pl
from jax.experimental.pallas import tpu as pltpu


def _softplus(z):
    # numerically stable softplus: max(z, 0) + log1p(exp(-|z|))
    return jnp.maximum(z, 0.0) + jnp.log1p(jnp.exp(-jnp.abs(z)))


def _mlstm_cell_kernel(x_ref, wf_ref, wi_ref, wh_ref, tri_ref, o_ref,
                       a_carry, m_run, l_run):
    # x_ref/o_ref: (tS, tN); w*_ref: (1, tN); tri_ref: (tS, tS) lower-tri ones.
    # carries (VMEM scratch, shape (1, tN)):
    #   a_carry: cumsum of log_f over all previous S-chunks
    #   m_run  : running max of z = log_values - a_star over previous chunks
    #   l_run  : running sum of exp(z - m_run) over previous chunks
    s = pl.program_id(1)

    @pl.when(s == 0)
    def _():
        a_carry[...] = jnp.zeros(a_carry.shape, jnp.float32)
        m_run[...] = jnp.full(m_run.shape, -1e30, jnp.float32)
        l_run[...] = jnp.zeros(l_run.shape, jnp.float32)

    x = x_ref[...].astype(jnp.float32)           # (tS, tN)
    wf = wf_ref[...].astype(jnp.float32)         # (1, tN) -> broadcasts over rows
    wi = wi_ref[...].astype(jnp.float32)
    wh = wh_ref[...].astype(jnp.float32)
    tri = tri_ref[...]                           # (tS, tS) f32

    # depthwise Conv1d(kernel_size=1, groups=D, bias=False) == per-channel scale
    f_gate = x * wf
    i_gate = x * wi
    hidden = x * wh

    # gate log-space reparameterisation (minLSTM style), with the shared
    # log1p(exp(-|diff|)) term computed once for both softplus(diff)/softplus(-diff)
    diff = _softplus(-f_gate) - _softplus(-i_gate)
    t = jnp.log1p(jnp.exp(-jnp.abs(diff)))
    log_f = -(jnp.maximum(diff, 0.0) + t)        # -softplus(diff)
    # log_i + log_tilde_h folded directly into log_values (fewer live temporaries)
    log_values = (jnp.minimum(diff, 0.0) - t) + jnp.where(
        hidden >= 0.0,
        jnp.log(jnp.maximum(hidden, 0.0) + 0.5),
        -_softplus(-hidden),
    )

    # inclusive cumsum of log_f within the chunk via a lower-triangular MXU matmul
    a_local = jnp.dot(tri, log_f, preferred_element_type=jnp.float32)
    a_star = a_carry[...] + a_local              # global cumsum of log_f
    z = log_values - a_star

    # running (per-prefix) stabiliser combined across chunks
    m_new = jnp.maximum(m_run[...], jnp.max(z, axis=0, keepdims=True))
    scale = jnp.exp(m_run[...] - m_new)          # in [0, 1] since m_new >= m_run
    e = jnp.exp(z - m_new)
    ce = jnp.dot(tri, e, preferred_element_type=jnp.float32)   # within-chunk prefix
    total = l_run[...] * scale + ce

    log_h = a_star + m_new + jnp.log(jnp.maximum(total, 1e-38))
    o_ref[...] = jnp.exp(log_h).astype(o_ref.dtype)

    # update carries for the next S-chunk
    last = a_star.shape[0] - 1
    a_carry[...] = a_star[last:, :]
    m_run[...] = m_new
    l_run[...] = total[last:, :]


def mlstm_cell_forward(x, w_f, w_i, w_h):
    """x: (B, S, D) float; w_*: (1, D) depthwise-conv weights. Returns (B, S, D)."""
    B, S, D = x.shape
    N = B * D

    # lane-dense packing: sequence on sublanes, batch*channel on lanes
    xs = jnp.transpose(x, (1, 0, 2)).reshape(S, N)
    wf = jnp.tile(jnp.reshape(w_f, (1, D)), (1, B))
    wi = jnp.tile(jnp.reshape(w_i, (1, D)), (1, B))
    wh = jnp.tile(jnp.reshape(w_h, (1, D)), (1, B))

    LANE = 128
    n_pad = (-N) % LANE
    if n_pad:
        xs = jnp.pad(xs, ((0, 0), (0, n_pad)))
        wf = jnp.pad(wf, ((0, 0), (0, n_pad)))
        wi = jnp.pad(wi, ((0, 0), (0, n_pad)))
        wh = jnp.pad(wh, ((0, 0), (0, n_pad)))
    Np = N + n_pad

    # lane tile (always a multiple of 128 -> unmasked stores) and S-chunk size
    tN = 512 if Np % 512 == 0 else (256 if Np % 256 == 0 else 128)
    if S % 256 == 0:
        tS = 256
    elif S % 128 == 0:
        tS = 128
    else:
        tS = S  # small / irregular sequences: single chunk

    # constant lower-triangular ones matrix, hoisted out of the kernel body
    tri = jnp.tril(jnp.ones((tS, tS), jnp.float32))

    out = pl.pallas_call(
        _mlstm_cell_kernel,
        out_shape=jax.ShapeDtypeStruct((S, Np), x.dtype),
        grid_spec=pltpu.PrefetchScalarGridSpec(
            num_scalar_prefetch=0,
            grid=(Np // tN, S // tS),
            in_specs=[
                pl.BlockSpec((tS, tN), lambda j, s: (s, j)),
                pl.BlockSpec((1, tN), lambda j, s: (0, j)),
                pl.BlockSpec((1, tN), lambda j, s: (0, j)),
                pl.BlockSpec((1, tN), lambda j, s: (0, j)),
                pl.BlockSpec((tS, tS), lambda j, s: (0, 0)),
            ],
            out_specs=pl.BlockSpec((tS, tN), lambda j, s: (s, j)),
            scratch_shapes=[
                pltpu.VMEM((1, tN), jnp.float32),   # a_carry
                pltpu.VMEM((1, tN), jnp.float32),   # m_run
                pltpu.VMEM((1, tN), jnp.float32),   # l_run
            ],
        ),
        compiler_params=pltpu.CompilerParams(
            dimension_semantics=("parallel", "arbitrary"),
        ),
    )(xs, wf, wi, wh, tri)

    return jnp.transpose(out[:, :N].reshape(S, B, D), (1, 0, 2))


def mlstm_cell_reference(x, w_f, w_i, w_h):
    """Pure-JAX reference mirroring the PyTorch forward."""
    x = x.astype(jnp.float32)
    sp = jax.nn.softplus
    f_gate = x * w_f
    i_gate = x * w_i
    hidden = x * w_h
    diff = sp(-f_gate) - sp(-i_gate)
    log_f = -sp(diff)
    log_i = -sp(-diff)
    log_tilde_h = jnp.where(hidden >= 0.0,
                            jnp.log(jax.nn.relu(hidden) + 0.5),
                            -sp(-hidden))
    log_values = log_i + log_tilde_h
    a_star = jnp.cumsum(log_f, axis=1)
    log_h = a_star + jax.lax.cumlogsumexp(log_values - a_star, axis=1)
    return jnp.exp(log_h)


if __name__ == "__main__":
    # small shapes consistent with the module: batch=2, context_length=8, embedding_dim=32
    B, S, D = 2, 8, 32
    key = jax.random.PRNGKey(0)
    kx, kf, ki, kh = jax.random.split(key, 4)
    x = jax.random.normal(kx, (B, S, D), dtype=jnp.float32)

    # NOTE: the module's reset_parameters() zeros these depthwise-conv weights
    # (which would make the output a constant); we use deterministic non-zero
    # values so the kernel math is exercised non-trivially.
    w_f = jax.random.normal(kf, (1, D), dtype=jnp.float32) * 0.5
    w_i = jax.random.normal(ki, (1, D), dtype=jnp.float32) * 0.5
    w_h = jax.random.normal(kh, (1, D), dtype=jnp.float32) * 0.5

    out = mlstm_cell_forward(x, w_f, w_i, w_h)
    jax.block_until_ready(out)

    ref = mlstm_cell_reference(x, w_f, w_i, w_h)
    assert out.shape == (B, S, D)
    max_err = float(jnp.max(jnp.abs(out.astype(jnp.float32) - ref)))
    if not bool(jnp.all(jnp.isfinite(out))) or max_err > 1e-4:
        raise SystemExit(f"MISMATCH: max abs err = {max_err}")
    print("KERNEL_OK")
</pallas_src>

<mosaic_0001>
module attributes {stable_mosaic.version = 11 : i64} {
  func.func @_mlstm_cell_kernel(%arg0: i32, %arg1: i32, %arg2: memref<8x128xf32, #tpu.memory_space<vmem>>, %arg3: memref<1x128xf32, #tpu.memory_space<vmem>>, %arg4: memref<1x128xf32, #tpu.memory_space<vmem>>, %arg5: memref<1x128xf32, #tpu.memory_space<vmem>>, %arg6: memref<8x8xf32, #tpu.memory_space<vmem>>, %arg7: memref<8x128xf32, #tpu.memory_space<vmem>>, %arg8: memref<1x128xf32, #tpu.memory_space<vmem>>, %arg9: memref<1x128xf32, #tpu.memory_space<vmem>>, %arg10: memref<1x128xf32, #tpu.memory_space<vmem>>) attributes {dimension_semantics = [#tpu.dimension_semantics<parallel>, #tpu.dimension_semantics<arbitrary>], iteration_bounds = array<i64: 1, 1>, scalar_prefetch = 0 : i64, scratch_operands = 3 : i64, tpu.core_type = #tpu.core_type<tc>, window_params = [{transform_indices = @transform_0, window_bounds = array<i64: 8, 128>}, {transform_indices = @transform_1, window_bounds = array<i64: 1, 128>}, {transform_indices = @transform_2, window_bounds = array<i64: 1, 128>}, {transform_indices = @transform_3, window_bounds = array<i64: 1, 128>}, {pipeline_mode = #tpu.pipeline_mode<synchronous>, transform_indices = @transform_4, window_bounds = array<i64: 8, 8>}, {transform_indices = @transform_5, window_bounds = array<i64: 8, 128>}]} {
    %c0_i32 = arith.constant 0 : i32
    %0 = arith.cmpi eq, %arg1, %c0_i32 : i32
    %1 = arith.extui %0 : i1 to i32
    %c0_i32_0 = arith.constant 0 : i32
    %2 = arith.cmpi ne, %1, %c0_i32_0 : i32
    scf.if %2 {
      %cst_46 = arith.constant 0.000000e+00 : f32
      %102 = vector.broadcast %cst_46 : f32 to vector<1x128xf32>
      %c0_47 = arith.constant 0 : index
      %c0_48 = arith.constant 0 : index
      %103 = vector.load %arg8[%c0_47, %c0_48] : memref<1x128xf32, #tpu.memory_space<vmem>>, vector<1x128xf32>
      tpu.vector_store %arg8[%c0_47, %c0_48], %102 {strides = array<i32>} : memref<1x128xf32, #tpu.memory_space<vmem>>, vector<1x128xf32>,
      %cst_49 = arith.constant -1.000000e+30 : f32
      %104 = vector.broadcast %cst_49 : f32 to vector<1x128xf32>
      %c0_50 = arith.constant 0 : index
      %c0_51 = arith.constant 0 : index
      %105 = vector.load %arg9[%c0_50, %c0_51] : memref<1x128xf32, #tpu.memory_space<vmem>>, vector<1x128xf32>
      tpu.vector_store %arg9[%c0_50, %c0_51], %104 {strides = array<i32>} : memref<1x128xf32, #tpu.memory_space<vmem>>, vector<1x128xf32>,
      %cst_52 = arith.constant 0.000000e+00 : f32
      %106 = vector.broadcast %cst_52 : f32 to vector<1x128xf32>
      %c0_53 = arith.constant 0 : index
      %c0_54 = arith.constant 0 : index
      %107 = vector.load %arg10[%c0_53, %c0_54] : memref<1x128xf32, #tpu.memory_space<vmem>>, vector<1x128xf32>
      tpu.vector_store %arg10[%c0_53, %c0_54], %106 {strides = array<i32>} : memref<1x128xf32, #tpu.memory_space<vmem>>, vector<1x128xf32>,
    } else {
    }
    %c0 = arith.constant 0 : index
    %c0_1 = arith.constant 0 : index
    %3 = vector.load %arg2[%c0, %c0_1] : memref<8x128xf32, #tpu.memory_space<vmem>>, vector<8x128xf32>
    %c0_2 = arith.constant 0 : index
    %c0_3 = arith.constant 0 : index
    %4 = vector.load %arg3[%c0_2, %c0_3] : memref<1x128xf32, #tpu.memory_space<vmem>>, vector<1x128xf32>
    %c0_4 = arith.constant 0 : index
    %c0_5 = arith.constant 0 : index
    %5 = vector.load %arg4[%c0_4, %c0_5] : memref<1x128xf32, #tpu.memory_space<vmem>>, vector<1x128xf32>
    %c0_6 = arith.constant 0 : index
    %c0_7 = arith.constant 0 : index
    %6 = vector.load %arg5[%c0_6, %c0_7] : memref<1x128xf32, #tpu.memory_space<vmem>>, vector<1x128xf32>
    %c0_8 = arith.constant 0 : index
    %c0_9 = arith.constant 0 : index
    %7 = vector.load %arg6[%c0_8, %c0_9] : memref<8x8xf32, #tpu.memory_space<vmem>>, vector<8x8xf32>
    %8 = vector.broadcast %4 : vector<1x128xf32> to vector<8x128xf32>
    %9 = arith.mulf %3, %8 : vector<8x128xf32>
    %10 = vector.broadcast %5 : vector<1x128xf32> to vector<8x128xf32>
    %11 = arith.mulf %3, %10 : vector<8x128xf32>
    %12 = vector.broadcast %6 : vector<1x128xf32> to vector<8x128xf32>
    %13 = arith.mulf %3, %12 : vector<8x128xf32>
    %cst = arith.constant 0.000000e+00 : f32
    %14 = vector.broadcast %cst : f32 to vector<8x128xf32>
    %15 = arith.subf %14, %9 : vector<8x128xf32>
    %cst_10 = arith.constant 0.000000e+00 : f32
    %16 = vector.broadcast %cst_10 : f32 to vector<8x128xf32>
    %17 = arith.maximumf %15, %16 : vector<8x128xf32>
    %18 = math.absf %15 : vector<8x128xf32>
    %cst_11 = arith.constant 0.000000e+00 : f32
    %19 = vector.broadcast %cst_11 : f32 to vector<8x128xf32>
    %20 = arith.subf %19, %18 : vector<8x128xf32>
    %21 = math.exp %20 : vector<8x128xf32>
    %22 = math.log1p %21 : vector<8x128xf32>
    %23 = arith.addf %17, %22 : vector<8x128xf32>
    %cst_12 = arith.constant 0.000000e+00 : f32
    %24 = vector.broadcast %cst_12 : f32 to vector<8x128xf32>
    %25 = arith.subf %24, %11 : vector<8x128xf32>
    %cst_13 = arith.constant 0.000000e+00 : f32
    %26 = vector.broadcast %cst_13 : f32 to vector<8x128xf32>
    %27 = arith.maximumf %25, %26 : vector<8x128xf32>
    %28 = math.absf %25 : vector<8x128xf32>
    %cst_14 = arith.constant 0.000000e+00 : f32
    %29 = vector.broadcast %cst_14 : f32 to vector<8x128xf32>
    %30 = arith.subf %29, %28 : vector<8x128xf32>
    %31 = math.exp %30 : vector<8x128xf32>
    %32 = math.log1p %31 : vector<8x128xf32>
    %33 = arith.addf %27, %32 : vector<8x128xf32>
    %34 = arith.subf %23, %33 : vector<8x128xf32>
    %35 = math.absf %34 : vector<8x128xf32>
    %cst_15 = arith.constant 0.000000e+00 : f32
    %36 = vector.broadcast %cst_15 : f32 to vector<8x128xf32>
    %37 = arith.subf %36, %35 : vector<8x128xf32>
    %38 = math.exp %37 : vector<8x128xf32>
    %39 = math.log1p %38 : vector<8x128xf32>
    %cst_16 = arith.constant 0.000000e+00 : f32
    %40 = vector.broadcast %cst_16 : f32 to vector<8x128xf32>
    %41 = arith.maximumf %34, %40 : vector<8x128xf32>
    %42 = arith.addf %41, %39 : vector<8x128xf32>
    %cst_17 = arith.constant 0.000000e+00 : f32
    %43 = vector.broadcast %cst_17 : f32 to vector<8x128xf32>
    %44 = arith.subf %43, %42 : vector<8x128xf32>
    %cst_18 = arith.constant 0.000000e+00 : f32
    %45 = vector.broadcast %cst_18 : f32 to vector<8x128xf32>
    %46 = arith.minimumf %34, %45 : vector<8x128xf32>
    %47 = arith.subf %46, %39 : vector<8x128xf32>
    %cst_19 = arith.constant 0.000000e+00 : f32
    %48 = vector.broadcast %cst_19 : f32 to vector<8x128xf32>
    %49 = arith.cmpf oge, %13, %48 : vector<8x128xf32>
    %cst_20 = arith.constant 0.000000e+00 : f32
    %50 = vector.broadcast %cst_20 : f32 to vector<8x128xf32>
    %51 = arith.maximumf %13, %50 : vector<8x128xf32>
    %cst_21 = arith.constant 5.000000e-01 : f32
    %52 = vector.broadcast %cst_21 : f32 to vector<8x128xf32>
    %53 = arith.addf %51, %52 : vector<8x128xf32>
    %54 = math.log %53 : vector<8x128xf32>
    %cst_22 = arith.constant 0.000000e+00 : f32
    %55 = vector.broadcast %cst_22 : f32 to vector<8x128xf32>
    %56 = arith.subf %55, %13 : vector<8x128xf32>
    %cst_23 = arith.constant 0.000000e+00 : f32
    %57 = vector.broadcast %cst_23 : f32 to vector<8x128xf32>
    %58 = arith.maximumf %56, %57 : vector<8x128xf32>
    %59 = math.absf %56 : vector<8x128xf32>
    %cst_24 = arith.constant 0.000000e+00 : f32
    %60 = vector.broadcast %cst_24 : f32 to vector<8x128xf32>
    %61 = arith.subf %60, %59 : vector<8x128xf32>
    %62 = math.exp %61 : vector<8x128xf32>
    %63 = math.log1p %62 : vector<8x128xf32>
    %64 = arith.addf %58, %63 : vector<8x128xf32>
    %cst_25 = arith.constant 0.000000e+00 : f32
    %65 = vector.broadcast %cst_25 : f32 to vector<8x128xf32>
    %66 = arith.subf %65, %64 : vector<8x128xf32>
    %67 = arith.select %49, %54, %66 : vector<8x128xi1>, vector<8x128xf32>
    %68 = arith.addf %47, %67 : vector<8x128xf32>
    %cst_26 = arith.constant dense<0.000000e+00> : vector<8x128xf32>
    %69 = tpu.matmul %7, %44, %cst_26 {dimension_numbers = #tpu.dot_dimension_numbers<[1], [0], [0], [1], [0, 0, 1, 1], [], []>} : vector<8x8xf32>, vector<8x128xf32>, vector<8x128xf32> -> vector<8x128xf32>
    %c0_27 = arith.constant 0 : index
    %c0_28 = arith.constant 0 : index
    %70 = vector.load %arg8[%c0_27, %c0_28] : memref<1x128xf32, #tpu.memory_space<vmem>>, vector<1x128xf32>
    %71 = vector.broadcast %70 : vector<1x128xf32> to vector<8x128xf32>
    %72 = arith.addf %71, %69 : vector<8x128xf32>
    %73 = arith.subf %68, %72 : vector<8x128xf32>
    %c0_29 = arith.constant 0 : index
    %c0_30 = arith.constant 0 : index
    %74 = vector.load %arg9[%c0_29, %c0_30] : memref<1x128xf32, #tpu.memory_space<vmem>>, vector<1x128xf32>
    %cst_31 = arith.constant dense<0xFF800000> : vector<128xf32>
    %75 = vector.multi_reduction <maximumf>, %73, %cst_31 [0] : vector<8x128xf32> to vector<128xf32>
    %76 = vector.shape_cast %75 : vector<128xf32> to vector<1x128xf32>
    %77 = arith.maximumf %74, %76 : vector<1x128xf32>
    %c0_32 = arith.constant 0 : index
    %c0_33 = arith.constant 0 : index
    %78 = vector.load %arg9[%c0_32, %c0_33] : memref<1x128xf32, #tpu.memory_space<vmem>>, vector<1x128xf32>
    %79 = arith.subf %78, %77 : vector<1x128xf32>
    %80 = math.exp %79 : vector<1x128xf32>
    %81 = vector.broadcast %77 : vector<1x128xf32> to vector<8x128xf32>
    %82 = arith.subf %73, %81 : vector<8x128xf32>
    %83 = math.exp %82 : vector<8x128xf32>
    %cst_34 = arith.constant dense<0.000000e+00> : vector<8x128xf32>
    %84 = tpu.matmul %7, %83, %cst_34 {dimension_numbers = #tpu.dot_dimension_numbers<[1], [0], [0], [1], [0, 0, 1, 1], [], []>} : vector<8x8xf32>, vector<8x128xf32>, vector<8x128xf32> -> vector<8x128xf32>
    %c0_35 = arith.constant 0 : index
    %c0_36 = arith.constant 0 : index
    %85 = vector.load %arg10[%c0_35, %c0_36] : memref<1x128xf32, #tpu.memory_space<vmem>>, vector<1x128xf32>
    %86 = arith.mulf %85, %80 : vector<1x128xf32>
    %87 = vector.broadcast %86 : vector<1x128xf32> to vector<8x128xf32>
    %88 = arith.addf %87, %84 : vector<8x128xf32>
    %89 = vector.broadcast %77 : vector<1x128xf32> to vector<8x128xf32>
    %90 = arith.addf %72, %89 : vector<8x128xf32>
    %cst_37 = arith.constant 9.99999935E-39 : f32
    %91 = vector.broadcast %cst_37 : f32 to vector<8x128xf32>
    %92 = arith.maximumf %88, %91 : vector<8x128xf32>
    %93 = math.log %92 : vector<8x128xf32>
    %94 = arith.addf %90, %93 : vector<8x128xf32>
    %95 = math.exp %94 : vector<8x128xf32>
    %c0_38 = arith.constant 0 : index
    %c0_39 = arith.constant 0 : index
    %96 = vector.load %arg7[%c0_38, %c0_39] : memref<8x128xf32, #tpu.memory_space<vmem>>, vector<8x128xf32>
    tpu.vector_store %arg7[%c0_38, %c0_39], %95 {strides = array<i32>} : memref<8x128xf32, #tpu.memory_space<vmem>>, vector<8x128xf32>,
    %97 = vector.extract_strided_slice %72 {offsets = [7, 0], sizes = [1, 128], strides = [1, 1]} : vector<8x128xf32> to vector<1x128xf32>
    %c0_40 = arith.constant 0 : index
    %c0_41 = arith.constant 0 : index
    %98 = vector.load %arg8[%c0_40, %c0_41] : memref<1x128xf32, #tpu.memory_space<vmem>>, vector<1x128xf32>
    tpu.vector_store %arg8[%c0_40, %c0_41], %97 {strides = array<i32>} : memref<1x128xf32, #tpu.memory_space<vmem>>, vector<1x128xf32>,
    %c0_42 = arith.constant 0 : index
    %c0_43 = arith.constant 0 : index
    %99 = vector.load %arg9[%c0_42, %c0_43] : memref<1x128xf32, #tpu.memory_space<vmem>>, vector<1x128xf32>
    tpu.vector_store %arg9[%c0_42, %c0_43], %77 {strides = array<i32>} : memref<1x128xf32, #tpu.memory_space<vmem>>, vector<1x128xf32>,
    %100 = vector.extract_strided_slice %88 {offsets = [7, 0], sizes = [1, 128], strides = [1, 1]} : vector<8x128xf32> to vector<1x128xf32>
    %c0_44 = arith.constant 0 : index
    %c0_45 = arith.constant 0 : index
    %101 = vector.load %arg10[%c0_44, %c0_45] : memref<1x128xf32, #tpu.memory_space<vmem>>, vector<1x128xf32>
    tpu.vector_store %arg10[%c0_44, %c0_45], %100 {strides = array<i32>} : memref<1x128xf32, #tpu.memory_space<vmem>>, vector<1x128xf32>,
    return
  }
  func.func @transform_0(%arg0: i32, %arg1: i32) -> (i32, i32) {
    %c0_i32 = arith.constant 0 : i32
    return %arg1, %arg0 : i32, i32
  }
  func.func @transform_1(%arg0: i32, %arg1: i32) -> (i32, i32) {
    %c0_i32 = arith.constant 0 : i32
    %c0_i32_0 = arith.constant 0 : i32
    return %c0_i32, %arg0 : i32, i32
  }
  func.func @transform_2(%arg0: i32, %arg1: i32) -> (i32, i32) {
    %c0_i32 = arith.constant 0 : i32
    %c0_i32_0 = arith.constant 0 : i32
    return %c0_i32, %arg0 : i32, i32
  }
  func.func @transform_3(%arg0: i32, %arg1: i32) -> (i32, i32) {
    %c0_i32 = arith.constant 0 : i32
    %c0_i32_0 = arith.constant 0 : i32
    return %c0_i32, %arg0 : i32, i32
  }
  func.func @transform_4(%arg0: i32, %arg1: i32) -> (i32, i32) {
    %c0_i32 = arith.constant 0 : i32
    %c0_i32_0 = arith.constant 0 : i32
    %c0_i32_1 = arith.constant 0 : i32
    return %c0_i32, %c0_i32_0 : i32, i32
  }
  func.func @transform_5(%arg0: i32, %arg1: i32) -> (i32, i32) {
    %c0_i32 = arith.constant 0 : i32
    return %arg1, %arg0 : i32, i32
  }
}

</mosaic_0001>

<llo_original>
// kernel: tpu_custom_call.1
$region0: #{tpu_custom_call.1}
  #allocation0 [shape = 'u32[]', space=smem, size = 0x4, offset = 0x4, fixed_abs, tag = 'smem constant byte address 0x4 - core index']
  #allocation1 [shape = 'u32[144,128]{1,0:T(1,128)}', space=vmem, size = 0x12000, scoped, tag = 'internal scratch']
  #allocation2 [shape = 'f32[1,128]{1,0:T(1,128)}', space=vmem, size = 0x200, scoped, tag = 'scratch operand']
  #allocation3 [shape = 'f32[1,128]{1,0:T(1,128)}', space=vmem, size = 0x200, scoped, tag = 'scratch operand']
  #allocation4 [shape = 'f32[1,128]{1,0:T(1,128)}', space=vmem, size = 0x200, scoped, tag = 'scratch operand']
  %s0 = inlined_call_operand.hbm [shape: f32[8,128], index: 0, kind: input, shape index: {}]
  %s1 = inlined_call_operand.vmem [shape: f32[1,128], index: 1, kind: input, shape index: {}]
  %s2 = inlined_call_operand.vmem [shape: f32[1,128], index: 2, kind: input, shape index: {}]
  %s3 = inlined_call_operand.vmem [shape: f32[1,128], index: 3, kind: input, shape index: {}]
  %s4 = inlined_call_operand.vmem [shape: f32[8,8], index: 4, kind: input, shape index: {}]
  %s5 = inlined_call_operand.hbm [shape: f32[8,128], index: 5, kind: output, shape index: {}]
  %s6 = sld [smem:[#allocation0]]
  $region38: #{tpu_custom_call.1} parent=0
    _
  %s8 = ssub.s32 1, %s6
  %s9 = scalar_select 0, %s8, %s6
  $region1: #{tpu_custom_call.1} parent=0
    #allocation5 [shape = 'u8[4096]{0}', space=vmem, size = 0x1000, scoped, tag = 'input window, operand 0, single buffered']
    #allocation6 [shape = 's32[1]{0}', space=sflag, size = 0x4, scoped, tag = 'scoped memory for tpu_custom_call.1']
    #allocation7 [shape = 's32[1]{0}', space=sflag, size = 0x4, scoped, tag = 'scoped memory for tpu_custom_call.1']
    #allocation8 [shape = 'u8[4096]{0}', space=vmem, size = 0x1000, scoped, tag = 'output window, operand 0, single buffered']
    %10 = vsyncpa [#allocation6], 0
    %11 = vsyncpa [#allocation7], 0
    // Predicated region
    $region2: #{tpu_custom_call.1} parent=1 // pred_check
      _
    $region3: #{tpu_custom_call.1} parent=1 // pred_check_branch
      %13 = sbr.rel (0) target = $region5
    $region4: #{tpu_custom_call.1} parent=1 // pred_region
      %s15 = ssub.s32 128, 128
      %16 = vsyncadd [#allocation6], %s15
      %s18 = sshll.u32 [#allocation5], 4
      %s19 = int_to_ptr.vmem [resolvable:$true] %s18
      %21 = dma.hbm_to_vmem [thread:$0]  %s0, 128, %s19, [#allocation6]
    $region5: #{tpu_custom_call.1} parent=1 // pred_fallthru
      _
    // Predicated region
    $region6: #{tpu_custom_call.1} parent=1 // pred_check
      _
    $region7: #{tpu_custom_call.1} parent=1 // pred_check_branch
      %23 = sbr.rel (0) target = $region9
    $region8: #{tpu_custom_call.1} parent=1 // pred_region
      _
    $region9: #{tpu_custom_call.1} parent=1 // pred_fallthru
      _
    // Predicated region
    $region10: #{tpu_custom_call.1} parent=1 // pred_check
      _
    $region11: #{tpu_custom_call.1} parent=1 // pred_check_branch
      %25 = sbr.rel (0) target = $region13
    $region12: #{tpu_custom_call.1} parent=1 // pred_region
      _
    $region13: #{tpu_custom_call.1} parent=1 // pred_fallthru
      _
    // Predicated region
    $region14: #{tpu_custom_call.1} parent=1 // pred_check
      _
    $region15: #{tpu_custom_call.1} parent=1 // pred_check_branch
      %27 = sbr.rel (0) target = $region17
    $region16: #{tpu_custom_call.1} parent=1 // pred_region
      _
    $region17: #{tpu_custom_call.1} parent=1 // pred_fallthru
      _
    // Predicated region
    $region18: #{tpu_custom_call.1} parent=1 // pred_check
      _
    $region19: #{tpu_custom_call.1} parent=1 // pred_check_branch
      %29 = sbr.rel (0) target = $region21
    $region20: #{tpu_custom_call.1} parent=1 // pred_region
      _
    $region21: #{tpu_custom_call.1} parent=1 // pred_fallthru
      _
    // Predicated region
    $region22: #{tpu_custom_call.1} parent=1 // pred_check
      _
    $region23: #{tpu_custom_call.1} parent=1 // pred_check_branch
      %31 = sbr.rel (0) target = $region25
    $region24: #{tpu_custom_call.1} parent=1 // pred_region
      %32 = dma.done [#allocation6], 128
    $region25: #{tpu_custom_call.1} parent=1 // pred_fallthru
      _
    %p33 = scmp.eq.s32.totalorder 0, 0
    // Predicated region
    $region26: #{tpu_custom_call.1} parent=1 // pred_check
      %p34 = pneg %p33
    $region27: #{tpu_custom_call.1} parent=1 // pred_check_branch
      %36 = sbr.rel (%p34) target = $region29
    $region28: #{tpu_custom_call.1} parent=1 // pred_region
      %37 = vst [vmem:[#allocation2] sm:$0x1] 0.0
      %38 = vst [vmem:[#allocation3] sm:$0x1] -1e+30
      %39 = vst [vmem:[#allocation4] sm:$0x1] 0.0
    $region29: #{tpu_custom_call.1} parent=1 // pred_fallthru
      _
    %v40 = vld [vmem:[#allocation5] sm:$0xff]
    %v41 = vld [vmem:[%s1] sm:$0x1]
    %v42 = vld [vmem:[%s2] sm:$0x1]
    %v43 = vld [vmem:[%s3] sm:$0x1]
    %v44 = vld [vmem:[%s4] sm:$0xff]
    %v46 = vlaneseq
    %v47 = vshrl.u32 %v46, 7
    %v48 = vsub.s32 0, %v47
    %v49 = vrot.slane %v41, %v48
    %v51 = vmul.f32 %v40, %v49
    %v53 = vlaneseq
    %v54 = vshrl.u32 %v53, 7
    %v55 = vsub.s32 0, %v54
    %v56 = vrot.slane %v42, %v55
    %v58 = vmul.f32 %v40, %v56
    %v60 = vlaneseq
    %v61 = vshrl.u32 %v60, 7
    %v62 = vsub.s32 0, %v61
    %v63 = vrot.slane %v43, %v62
    %v65 = vmul.f32 %v40, %v63
    %v66 = vsub.f32 0.0, %v51
    %v67 = vmax.f32 %v66, 0.0
    %v68 = vand.u32 2147483647, %v66
    %v69 = vsub.f32 0.0, %v68
    %v70 = vmul.f32 %v69, 1.442695
    %v71 = vpow.pop %v70
    %v72 = vadd.f32 %v71, 1.0
    %v73 = vlog2.pop %v72
    %v74 = vmul.f32 %v73, 0.6931472
    %v75 = vmul.f32 -0.5, %v71
    %v76 = vadd.f32 %v75, 1.0
    %v77 = vmul.f32 %v76, %v71
    %v78 = vand.u32 2147483647, %v71
    %vm79 = vcmp.lt.f32.partialorder %v78, 0.0004427343
    %v80 = vsel %vm79, %v77, %v74
    %v81 = vadd.f32 %v67, %v80
    %v82 = vsub.f32 0.0, %v58
    %v83 = vmax.f32 %v82, 0.0
    %v84 = vand.u32 2147483647, %v82
    %v85 = vsub.f32 0.0, %v84
    %v86 = vmul.f32 %v85, 1.442695
    %v87 = vpow.pop %v86
    %v88 = vadd.f32 %v87, 1.0
    %v89 = vlog2.pop %v88
    %v90 = vmul.f32 %v89, 0.6931472
    %v91 = vmul.f32 -0.5, %v87
    %v92 = vadd.f32 %v91, 1.0
    %v93 = vmul.f32 %v92, %v87
    %v94 = vand.u32 2147483647, %v87
    %vm95 = vcmp.lt.f32.partialorder %v94, 0.0004427343
    %v96 = vsel %vm95, %v93, %v90
    %v97 = vadd.f32 %v83, %v96
    %v98 = vsub.f32 %v81, %v97
    %v99 = vand.u32 2147483647, %v98
    %v100 = vsub.f32 0.0, %v99
    %v101 = vmul.f32 %v100, 1.442695
    %v102 = vpow.pop %v101
    %v103 = vadd.f32 %v102, 1.0
    %v104 = vlog2.pop %v103
    %v105 = vmul.f32 %v104, 0.6931472
    %v106 = vmul.f32 -0.5, %v102
    %v107 = vadd.f32 %v106, 1.0
    %v108 = vmul.f32 %v107, %v102
    %v109 = vand.u32 2147483647, %v102
    %vm110 = vcmp.lt.f32.partialorder %v109, 0.0004427343
    %v111 = vsel %vm110, %v108, %v105
    %v112 = vmax.f32 %v98, 0.0
    %v113 = vadd.f32 %v112, %v111
    %v114 = vsub.f32 0.0, %v113
    %v115 = vmin.f32 %v98, 0.0
    %v116 = vsub.f32 %v115, %v111
    %vm117 = vcmp.ge.f32.partialorder %v65, 0.0
    %v118 = vmax.f32 %v65, 0.0
    %v119 = vadd.f32 %v118, 0.5
    %v120 = vlog2.pop %v119
    %v121 = vmul.f32 %v120, 0.6931472
    %v122 = vsub.f32 0.0, %v65
    %v123 = vmax.f32 %v122, 0.0
    %v124 = vand.u32 2147483647, %v122
    %v125 = vsub.f32 0.0, %v124
    %v126 = vmul.f32 %v125, 1.442695
    %v127 = vpow.pop %v126
    %v128 = vadd.f32 %v127, 1.0
    %v129 = vlog2.pop %v128
    %v130 = vmul.f32 %v129, 0.6931472
    %v131 = vmul.f32 -0.5, %v127
    %v132 = vadd.f32 %v131, 1.0
    %v133 = vmul.f32 %v132, %v127
    %v134 = vand.u32 2147483647, %v127
    %vm135 = vcmp.lt.f32.partialorder %v134, 0.0004427343
    %v136 = vsel %vm135, %v133, %v130
    %v137 = vadd.f32 %v123, %v136
    %v138 = vsub.f32 0.0, %v137
    %v139 = vsel %vm117, %v121, %v138
    %v140 = vadd.f32 %v116, %v139
    %vm141 = vcmask 64512
    %v143 = vsel %vm141, %v44, 0
    %145 = vmatprep.subr.mxu0 0.0
    %146 = vmatpush1.msra.mxu0 %v114
    %147 = vmatprep.subr.mxu0 0.0
    %148 = vmatpush1.msra.mxu0 0.0
    %149 = vmatprep.subr.mxu0 0.0
    %150 = vmatpush1.msra.mxu0 0.0
    %151 = vmatprep.subr.mxu0 0.0
    %152 = vmatpush1.msra.mxu0 0.0
    %153 = vmatprep.subr.mxu0 0.0
    %154 = vmatpush1.msra.mxu0 0.0
    %155 = vmatprep.subr.mxu0 0.0
    %156 = vmatpush1.msra.mxu0 0.0
    %157 = vmatprep.subr.mxu0 0.0
    %158 = vmatpush1.msra.mxu0 0.0
    %159 = vmatprep.subr.mxu0 0.0
    %160 = vmatpush1.msra.mxu0 0.0
    %161 = vmatprep.subr.mxu0 0.0
    %162 = vmatpush1.msra.mxu0 0.0
    %163 = vmatprep.subr.mxu0 0.0
    %164 = vmatpush1.msra.mxu0 0.0
    %165 = vmatprep.subr.mxu0 0.0
    %166 = vmatpush1.msra.mxu0 0.0
    %167 = vmatprep.subr.mxu0 0.0
    %168 = vmatpush1.msra.mxu0 0.0
    %169 = vmatprep.subr.mxu0 0.0
    %170 = vmatpush1.msra.mxu0 0.0
    %171 = vmatprep.subr.mxu0 0.0
    %172 = vmatpush1.msra.mxu0 0.0
    %173 = vmatprep.subr.mxu0 0.0
    %174 = vmatpush1.msra.mxu0 0.0
    %175 = vmatprep.subr.mxu0 0.0
    %176 = vmatpush1.msra.mxu0 0.0
    %177 = vmatprep.subr.mxu0 0.0
    %178 = vmatpush1.msra.mxu0 0.0
    %179 = vmatprep.subr.mxu0 0.0
    %180 = vmatpush1.msra.mxu0 0.0
    %181 = vmatprep.subr.mxu0 0.0
    %182 = vmatpush1.msra.mxu0 0.0
    %183 = vmatprep.subr.mxu0 0.0
    %184 = vmatpush1.msra.mxu0 0.0
    %185 = vmatprep.subr.mxu0 0.0
    %186 = vmatpush1.msra.mxu0 0.0
    %187 = vmatprep.subr.mxu0 0.0
    %188 = vmatpush1.msra.mxu0 0.0
    %189 = vmatprep.subr.mxu0 0.0
    %190 = vmatpush1.msra.mxu0 0.0
    %191 = vmatprep.subr.mxu0 0.0
    %192 = vmatpush1.msra.mxu0 0.0
    %193 = vmatprep.subr.mxu0 0.0
    %194 = vmatpush1.msra.mxu0 0.0
    %195 = vmatprep.subr.mxu0 0.0
    %196 = vmatpush1.msra.mxu0 0.0
    %197 = vmatprep.subr.mxu0 0.0
    %198 = vmatpush1.msra.mxu0 0.0
    %199 = vmatprep.subr.mxu0 0.0
    %200 = vmatpush1.msra.mxu0 0.0
    %201 = vmatprep.subr.mxu0 0.0
    %202 = vmatpush1.msra.mxu0 0.0
    %203 = vmatprep.subr.mxu0 0.0
    %204 = vmatpush1.msra.mxu0 0.0
    %205 = vmatprep.subr.mxu0 0.0
    %206 = vmatpush1.msra.mxu0 0.0
    %207 = vmatprep.subr.mxu0 0.0
    %208 = vmatpush1.msra.mxu0 0.0
    %209 = vmatprep.mubr.f32.mxu0 0.0
    %210 = vmatmul.mubr.f32.gmra.mrb[0].mxu0 %v143
    %v211 = vpop.f32.mrb[0].mxu0
    %v212 = vadd.f32 0.0, %v211
    %v213 = vpop.f32.mrb[0].mxu0
    %214 = vdwg.mxu0
    %v215 = vld [vmem:[#allocation2] sm:$0x1]
    %v217 = vlaneseq
    %v218 = vshrl.u32 %v217, 7
    %v219 = vsub.s32 0, %v218
    %v220 = vrot.slane %v215, %v219
    %v222 = vadd.f32 %v220, %v212
    %v223 = vsub.f32 %v140, %v222
    %v224 = vld [vmem:[#allocation3] sm:$0x1]
    %v225 = vrot.slane %v223, 4
    %v226 = vmax.f32 %v223, %v225
    %v227 = vrot.slane %v226, 2
    %v228 = vmax.f32 %v226, %v227
    %v229 = vrot.slane %v228, 1
    %v230 = vmax.f32 %v228, %v229
    %v231 = vmax.f32 %v224, %v230
    %v232 = vsub.f32 %v224, %v231
    %v233 = vmul.f32 %v232, 1.442695
    %v234 = vpow.pop %v233
    %v236 = vlaneseq
    %v237 = vshrl.u32 %v236, 7
    %v238 = vsub.s32 0, %v237
    %v239 = vrot.slane %v231, %v238
    %v241 = vsub.f32 %v223, %v239
    %v242 = vmul.f32 %v241, 1.442695
    %v243 = vpow.pop %v242
    %244 = vmatprep.subr.mxu0 0.0
    %245 = vmatpush1.msra.mxu0 %v243
    %246 = vmatprep.subr.mxu0 0.0
    %247 = vmatpush1.msra.mxu0 0.0
    %248 = vmatprep.subr.mxu0 0.0
    %249 = vmatpush1.msra.mxu0 0.0
    %250 = vmatprep.subr.mxu0 0.0
    %251 = vmatpush1.msra.mxu0 0.0
    %252 = vmatprep.subr.mxu0 0.0
    %253 = vmatpush1.msra.mxu0 0.0
    %254 = vmatprep.subr.mxu0 0.0
    %255 = vmatpush1.msra.mxu0 0.0
    %256 = vmatprep.subr.mxu0 0.0
    %257 = vmatpush1.msra.mxu0 0.0
    %258 = vmatprep.subr.mxu0 0.0
    %259 = vmatpush1.msra.mxu0 0.0
    %260 = vmatprep.subr.mxu0 0.0
    %261 = vmatpush1.msra.mxu0 0.0
    %262 = vmatprep.subr.mxu0 0.0
    %263 = vmatpush1.msra.mxu0 0.0
    %264 = vmatprep.subr.mxu0 0.0
    %265 = vmatpush1.msra.mxu0 0.0
    %266 = vmatprep.subr.mxu0 0.0
    %267 = vmatpush1.msra.mxu0 0.0
    %268 = vmatprep.subr.mxu0 0.0
    %269 = vmatpush1.msra.mxu0 0.0
    %270 = vmatprep.subr.mxu0 0.0
    %271 = vmatpush1.msra.mxu0 0.0
    %272 = vmatprep.subr.mxu0 0.0
    %273 = vmatpush1.msra.mxu0 0.0
    %274 = vmatprep.subr.mxu0 0.0
    %275 = vmatpush1.msra.mxu0 0.0
    %276 = vmatprep.subr.mxu0 0.0
    %277 = vmatpush1.msra.mxu0 0.0
    %278 = vmatprep.subr.mxu0 0.0
    %279 = vmatpush1.msra.mxu0 0.0
    %280 = vmatprep.subr.mxu0 0.0
    %281 = vmatpush1.msra.mxu0 0.0
    %282 = vmatprep.subr.mxu0 0.0
    %283 = vmatpush1.msra.mxu0 0.0
    %284 = vmatprep.subr.mxu0 0.0
    %285 = vmatpush1.msra.mxu0 0.0
    %286 = vmatprep.subr.mxu0 0.0
    %287 = vmatpush1.msra.mxu0 0.0
    %288 = vmatprep.subr.mxu0 0.0
    %289 = vmatpush1.msra.mxu0 0.0
    %290 = vmatprep.subr.mxu0 0.0
    %291 = vmatpush1.msra.mxu0 0.0
    %292 = vmatprep.subr.mxu0 0.0
    %293 = vmatpush1.msra.mxu0 0.0
    %294 = vmatprep.subr.mxu0 0.0
    %295 = vmatpush1.msra.mxu0 0.0
    %296 = vmatprep.subr.mxu0 0.0
    %297 = vmatpush1.msra.mxu0 0.0
    %298 = vmatprep.subr.mxu0 0.0
    %299 = vmatpush1.msra.mxu0 0.0
    %300 = vmatprep.subr.mxu0 0.0
    %301 = vmatpush1.msra.mxu0 0.0
    %302 = vmatprep.subr.mxu0 0.0
    %303 = vmatpush1.msra.mxu0 0.0
    %304 = vmatprep.subr.mxu0 0.0
    %305 = vmatpush1.msra.mxu0 0.0
    %306 = vmatprep.subr.mxu0 0.0
    %307 = vmatpush1.msra.mxu0 0.0
    %308 = vmatprep.mubr.f32.mxu0 0.0
    %309 = vmatmul.mubr.f32.gmra.mrb[0].mxu0 %v143
    %v310 = vpop.f32.mrb[0].mxu0
    %v311 = vadd.f32 0.0, %v310
    %v312 = vpop.f32.mrb[0].mxu0
    %313 = vdwg.mxu0
    %v314 = vld [vmem:[#allocation4] sm:$0x1]
    %v315 = vmul.f32 %v314, %v234
    %v317 = vlaneseq
    %v318 = vshrl.u32 %v317, 7
    %v319 = vsub.s32 0, %v318
    %v320 = vrot.slane %v315, %v319
    %v322 = vadd.f32 %v320, %v311
    %v323 = vadd.f32 %v222, %v239
    %v324 = vmax.f32 %v322, 1e-38
    %v325 = vlog2.pop %v324
    %v326 = vmul.f32 %v325, 0.6931472
    %v327 = vadd.f32 %v323, %v326
    %v328 = vmul.f32 %v327, 1.442695
    %v329 = vpow.pop %v328
    %330 = vst [vmem:[#allocation8] sm:$0xff] %v329
    %331 = vst [vmem:[#allocation2 - $0x7] sm:$0x80] %v222
    %332 = vst [vmem:[#allocation3] sm:$0x1] %v231
    %333 = vst [vmem:[#allocation4 - $0x7] sm:$0x80] %v322
    // Predicated region
    $region30: #{tpu_custom_call.1} parent=1 // pred_check
      _
    $region31: #{tpu_custom_call.1} parent=1 // pred_check_branch
      %335 = sbr.rel (0) target = $region33
    $region32: #{tpu_custom_call.1} parent=1 // pred_region
      %s337 = ssub.s32 128, 128
      %338 = vsyncadd [#allocation7], %s337
      %s340 = sshll.u32 [#allocation8], 4
      %s341 = int_to_ptr.vmem [resolvable:$true] %s340
      %343 = dma.vmem_to_hbm [thread:$0]  %s341, 128, %s5, [#allocation7]
    $region33: #{tpu_custom_call.1} parent=1 // pred_fallthru
      _
    // Predicated region
    $region34: #{tpu_custom_call.1} parent=1 // pred_check
      _
    $region35: #{tpu_custom_call.1} parent=1 // pred_check_branch
      %345 = sbr.rel (0) target = $region37
    $region36: #{tpu_custom_call.1} parent=1 // pred_region
      %346 = dma.done [#allocation7], 128
    $region37: #{tpu_custom_call.1} parent=1 // pred_fallthru
      _
    %347 = vsyncpa [#allocation6], 1
    %348 = vsyncpa [#allocation7], 1

</llo_original>
